<compile_context>
chip_gen: v7x
topology: tpu7x:2x2x1
jax: 0.10.0
libtpu: 0.0.40
codegen_flags: <defaults>
</compile_context>

<pallas_src>
import jax
import jax.numpy as jnp
from jax.experimental import pallas as pl
from jax.experimental.pallas import tpu as pltpu


def _proj_kernel(cols_ref, w_ref, b_ref, o_ref):
    # cols_ref: (K, tm) patch columns; w_ref: (E, K); b_ref: (E, 1); o_ref: (E, tm)
    # NOTE: the last grid block along tm may be ragged; its out-of-range columns
    # are computed on padded garbage and masked on store.  That is safe here
    # because every output column depends only on its own cols column — do not
    # add any cross-column reduction without revisiting this.
    acc = jnp.dot(w_ref[...], cols_ref[...], preferred_element_type=jnp.float32)
    o_ref[...] = (acc + b_ref[...]).astype(o_ref.dtype)


def _pick_tile_hw(hw, n_batch):
    """Lane-dim tile over Ho*Wo.

    Full extent when small (always a legal block), otherwise a multiple of 128
    capped at 4096 (double-buffered (K + E) x tm f32 stays <~5 MiB, far below
    the 32 MiB scoped VMEM on v5e/v6e/v7x).  Keep >= 2 total grid steps when
    possible so the 'parallel' axes load-balance across v7x's two TensorCores.
    """
    cap = 4096
    if hw <= cap:
        tm = hw
        if n_batch < 2 and hw >= 256:
            # Split a single-image workload into two lane-aligned blocks.
            tm = (((hw + 1) // 2) + 127) // 128 * 128
        return tm
    return cap


def _im2col_cmajor(x, patch, k, pad):
    """NCHW -> (N, K, Ho*Wo).

    K is flattened in PyTorch (c, kh, kw) order (matching weight.reshape(E, K))
    and the trailing dim is flattened (ho, wo), so the Pallas GEMM writes the
    NCHW output directly with no post-transpose.
    """
    n, c, h, w = x.shape
    if pad > 0:
        x = jnp.pad(x, ((0, 0), (0, 0), (pad, pad), (pad, pad)), mode="reflect")
    hp, wp = x.shape[2], x.shape[3]
    ho = (hp - k) // patch + 1
    wo = (wp - k) // patch + 1

    if k == patch and pad == 0:
        # Default PatchEmbed config: non-overlapping patches.
        if (h % patch) or (w % patch):
            x = x[:, :, : ho * patch, : wo * patch]   # PyTorch drops the remainder
        cols = x.reshape(n, c, ho, patch, wo, patch)  # (N, C, ho, kh, wo, kw)
        # Single materialized layout pass (same data volume as x).
        # TODO(synk): fold this transpose into the kernel (in-kernel lane
        # de-interleave); left in the wrapper for lowering robustness.
        cols = cols.transpose(0, 1, 3, 5, 2, 4)       # (N, C, kh, kw, Ho, Wo)
        return cols.reshape(n, c * patch * patch, ho * wo), ho, wo

    # Overlapping / padded path (kernel_size != patch_size; not the module
    # default).  Correctness-first window gather via k*k strided slices.
    # TODO(synk): a production path should fuse this gather into the kernel or
    # dispatch to lax.conv_general_dilated instead of materializing k^2 slices.
    pieces = []
    for di in range(k):            # kh
        for dj in range(k):        # kw
            pieces.append(
                jax.lax.slice(
                    x,
                    (0, 0, di, dj),
                    (n, c, di + (ho - 1) * patch + 1, dj + (wo - 1) * patch + 1),
                    (1, 1, patch, patch),
                )
            )                                          # each (N, C, Ho, Wo)
    cols = jnp.stack(pieces, axis=2)                   # (N, C, k*k, Ho, Wo)
    return cols.reshape(n, c * k * k, ho * wo), ho, wo


def patch_embed_forward(x, weight, bias, *, patch_size=4, kernel_size=None):
    """Pallas implementation of PatchEmbed.forward (returns NCHW).

    x:      (N, C, H, W) float32
    weight: (E, C, k, k) float32   (PyTorch Conv2d layout)
    bias:   (E,)         float32
    """
    if kernel_size is None:
        kernel_size = patch_size
    pad = (kernel_size - patch_size + 1) // 2
    assert pad >= 0, "negative implicit padding is not supported (as in PyTorch)"

    n, c, h, w = x.shape
    e = weight.shape[0]
    k_elems = c * kernel_size * kernel_size

    cols, ho, wo = _im2col_cmajor(x, patch_size, kernel_size, pad)  # (N, K, Ho*Wo)
    hw = ho * wo
    w2d = weight.reshape(e, k_elems)       # (E, K)
    b2d = bias.reshape(e, 1)               # (E, 1)

    tm = _pick_tile_hw(hw, n)
    grid = (n, pl.cdiv(hw, tm))

    itemsize = jnp.dtype(x.dtype).itemsize
    cost = pl.CostEstimate(
        flops=2 * n * hw * k_elems * e,
        transcendentals=0,
        bytes_accessed=int((cols.size + w2d.size + b2d.size + n * e * hw) * itemsize),
    )

    out3 = pl.pallas_call(
        _proj_kernel,
        out_shape=jax.ShapeDtypeStruct((n, e, hw), x.dtype),
        grid_spec=pltpu.PrefetchScalarGridSpec(
            num_scalar_prefetch=0,
            grid=grid,
            in_specs=[
                # (K, tm) patch-column tile: lane dim = tm (dense DMA rows).
                pl.BlockSpec((None, k_elems, tm), lambda i, j: (i, 0, j)),
                # Projection weights / bias stay resident across the grid.
                pl.BlockSpec((e, k_elems), lambda i, j: (0, 0)),
                pl.BlockSpec((e, 1), lambda i, j: (0, 0)),
            ],
            # NCHW-order output block: lane dim = tm (dense stores), no
            # post-kernel transpose needed.
            out_specs=pl.BlockSpec((None, e, tm), lambda i, j: (i, 0, j)),
        ),
        compiler_params=pltpu.CompilerParams(
            dimension_semantics=("parallel", "parallel"),
            vmem_limit_bytes=32 * 1024 * 1024,   # safe on v5e/v6e/v7x; blocks are small
        ),
        cost_estimate=cost,
    )(cols, w2d, b2d)

    # Free (metadata-only) reshape to NCHW.
    return out3.reshape(n, e, ho, wo)


if __name__ == "__main__":
    key = jax.random.PRNGKey(0)
    kx, kw, kb = jax.random.split(key, 3)

    patch_size = 4
    in_chans = 3
    embed_dim = 96
    kernel_size = patch_size   # module default: kernel_size=None -> patch_size

    # Small NCHW input consistent with the module defaults.
    x = jax.random.normal(kx, (2, in_chans, 16, 16), dtype=jnp.float32)
    # Deterministic Conv2d parameters (PyTorch layout: (E, C, k, k) and (E,)).
    weight = 0.05 * jax.random.normal(
        kw, (embed_dim, in_chans, kernel_size, kernel_size), dtype=jnp.float32)
    bias = 0.05 * jax.random.normal(kb, (embed_dim,), dtype=jnp.float32)

    out = patch_embed_forward(x, weight, bias,
                              patch_size=patch_size, kernel_size=kernel_size)
    out = jax.block_until_ready(out)

    # Reference: reflect-pad + strided conv in plain XLA.
    pad = (kernel_size - patch_size + 1) // 2
    xp = x if pad == 0 else jnp.pad(
        x, ((0, 0), (0, 0), (pad, pad), (pad, pad)), mode="reflect")
    ref = jax.lax.conv_general_dilated(
        xp, weight, window_strides=(patch_size, patch_size), padding="VALID",
        dimension_numbers=("NCHW", "OIHW", "NCHW"),
        precision=jax.lax.Precision.HIGHEST,
    ) + bias.reshape(1, embed_dim, 1, 1)

    assert out.shape == ref.shape, (out.shape, ref.shape)
    assert jnp.allclose(out, ref, atol=5e-3, rtol=5e-3), "mismatch vs reference conv"

    print("KERNEL_OK")
</pallas_src>

<mosaic_0001>
module attributes {stable_mosaic.version = 11 : i64} {
  func.func @_proj_kernel(%arg0: i32, %arg1: i32, %arg2: memref<1x48x16xf32, #tpu.memory_space<vmem>>, %arg3: memref<96x48xf32, #tpu.memory_space<vmem>>, %arg4: memref<96x1xf32, #tpu.memory_space<vmem>>, %arg5: memref<1x96x16xf32, #tpu.memory_space<vmem>>) attributes {dimension_semantics = [#tpu.dimension_semantics<parallel>, #tpu.dimension_semantics<parallel>], iteration_bounds = array<i64: 2, 1>, scalar_prefetch = 0 : i64, scratch_operands = 0 : i64, tpu.core_type = #tpu.core_type<tc>, window_params = [{transform_indices = @transform_0, window_bounds = array<i64: 1, 48, 16>}, {pipeline_mode = #tpu.pipeline_mode<synchronous>, transform_indices = @transform_1, window_bounds = array<i64: 96, 48>}, {pipeline_mode = #tpu.pipeline_mode<synchronous>, transform_indices = @transform_2, window_bounds = array<i64: 96, 1>}, {transform_indices = @transform_3, window_bounds = array<i64: 1, 96, 16>}]} {
    %c0 = arith.constant 0 : index
    %c0_0 = arith.constant 0 : index
    %0 = vector.load %arg3[%c0, %c0_0] : memref<96x48xf32, #tpu.memory_space<vmem>>, vector<96x48xf32>
    %c0_1 = arith.constant 0 : index
    %c0_2 = arith.constant 0 : index
    %c0_3 = arith.constant 0 : index
    %1 = vector.load %arg2[%c0_1, %c0_2, %c0_3] : memref<1x48x16xf32, #tpu.memory_space<vmem>>, vector<1x48x16xf32>
    %2 = vector.shape_cast %1 : vector<1x48x16xf32> to vector<48x16xf32>
    %cst = arith.constant dense<0.000000e+00> : vector<96x16xf32>
    %3 = tpu.matmul %0, %2, %cst {dimension_numbers = #tpu.dot_dimension_numbers<[1], [0], [0], [1], [0, 0, 1, 1], [], []>} : vector<96x48xf32>, vector<48x16xf32>, vector<96x16xf32> -> vector<96x16xf32>
    %c0_4 = arith.constant 0 : index
    %c0_5 = arith.constant 0 : index
    %4 = vector.load %arg4[%c0_4, %c0_5] : memref<96x1xf32, #tpu.memory_space<vmem>>, vector<96x1xf32>
    %5 = vector.broadcast %4 : vector<96x1xf32> to vector<96x16xf32>
    %6 = arith.addf %3, %5 : vector<96x16xf32>
    %c0_6 = arith.constant 0 : index
    %c0_7 = arith.constant 0 : index
    %c0_8 = arith.constant 0 : index
    %7 = vector.load %arg5[%c0_6, %c0_7, %c0_8] : memref<1x96x16xf32, #tpu.memory_space<vmem>>, vector<1x96x16xf32>
    %8 = vector.shape_cast %7 : vector<1x96x16xf32> to vector<96x16xf32>
    %9 = vector.shape_cast %6 : vector<96x16xf32> to vector<1x96x16xf32>
    tpu.vector_store %arg5[%c0_6, %c0_7, %c0_8], %9 {strides = array<i32>} : memref<1x96x16xf32, #tpu.memory_space<vmem>>, vector<1x96x16xf32>,
    return
  }
  func.func @transform_0(%arg0: i32, %arg1: i32) -> (i32, i32, i32) {
    %c0_i32 = arith.constant 0 : i32
    %c0_i32_0 = arith.constant 0 : i32
    return %arg0, %c0_i32, %arg1 : i32, i32, i32
  }
  func.func @transform_1(%arg0: i32, %arg1: i32) -> (i32, i32) {
    %c0_i32 = arith.constant 0 : i32
    %c0_i32_0 = arith.constant 0 : i32
    %c0_i32_1 = arith.constant 0 : i32
    return %c0_i32, %c0_i32_0 : i32, i32
  }
  func.func @transform_2(%arg0: i32, %arg1: i32) -> (i32, i32) {
    %c0_i32 = arith.constant 0 : i32
    %c0_i32_0 = arith.constant 0 : i32
    %c0_i32_1 = arith.constant 0 : i32
    return %c0_i32, %c0_i32_0 : i32, i32
  }
  func.func @transform_3(%arg0: i32, %arg1: i32) -> (i32, i32, i32) {
    %c0_i32 = arith.constant 0 : i32
    %c0_i32_0 = arith.constant 0 : i32
    return %arg0, %c0_i32, %arg1 : i32, i32, i32
  }
}

</mosaic_0001>

<llo_original>
// kernel: tpu_custom_call.1
$region0: #{tpu_custom_call.1}
  #allocation0 [shape = 'u32[]', space=smem, size = 0x4, offset = 0x4, fixed_abs, tag = 'smem constant byte address 0x4 - core index']
  #allocation1 [shape = 'u32[144,128]{1,0:T(1,128)}', space=vmem, size = 0x12000, scoped, tag = 'internal scratch']
  %s0 = inlined_call_operand.vmem [shape: f32[2,48,16], index: 0, kind: input, shape index: {}]
  %s1 = inlined_call_operand.vmem [shape: f32[96,48], index: 1, kind: input, shape index: {}]
  %s2 = inlined_call_operand.vmem [shape: f32[96,1], index: 2, kind: input, shape index: {}]
  %s3 = inlined_call_operand.vmem [shape: f32[2,96,16], index: 3, kind: output, shape index: {}]
  %s4 = sld [smem:[#allocation0]]
  $region45: #{tpu_custom_call.1} parent=0
    _
  %s6 = ssub.s32 1, %s4
  %s7 = scalar_select 0, %s6, %s4
  loop: start=0, step=1, limit=4
  $region2: #{tpu_custom_call.1} parent=0 // loop_pre_header
    _
  $region3: #{tpu_custom_call.1} parent=0 // loop_header
    %s9 = sphi 0, %s13
    %p10 = scmp.ge.s32.totalorder %s9, 4
    %s16 = sphi 0, %s28
    %s17 = sphi 0, %s24
    %s18 = sphi 0, %s16
    %s19 = sphi 0, %s17
    %s20 = sphi 0, %s18
    %s21 = sphi 0, %s19
    %s33 = sphi 0, %s35
    %s36 = sphi 0, %s33
    %s37 = sphi 0, %s36
    %s53 = sphi 0, %s37
    %s57 = sphi 0, %s57
    %s59 = sphi 0, %s57
    %s60 = sphi 0, %s59
    %s74 = sphi 0, %s60
    %s78 = sphi 0, %s78
    %s80 = sphi 0, %s78
    %s81 = sphi 0, %s80
    %s95 = sphi 0, %s81
    %s103 = sphi 0, %s105
    %s106 = sphi 0, %s103
    %s107 = sphi 0, %s106
    %s123 = sphi 0, %s107
  $region4: #{tpu_custom_call.1} parent=0 // loop_header_branch
    %12 = sbr.rel (%p10) target = $region8
  $region5: #{tpu_custom_call.1} parent=0 // loop_body
    %s14 = ssub.s32 %s9, 1
    %s15 = ssub.s32 %s9, 2
    %s22 = sadd.s32 1, %s17
    %p23 = scmp.ge.s32.totalorder %s22, 1
    %s24 = scalar_select %p23, 0, %s22
    %s25 = sadd.s32 1, %s16
    %s26 = scalar_select %p23, %s25, %s16
    %p27 = scmp.ge.s32.totalorder %s26, 2
    %s28 = scalar_select %p27, 0, %s26
    %s29 = ssub.s32 %s16, %s28
    %s30 = ssub.s32 %s17, %s24
    %s31 = sor.u32 %s29, %s30
    %p32 = scmp.eq.s32.totalorder %s31, 0
    %s34 = sadd.s32 %s33, 1
    %s35 = scalar_select %p32, %s33, %s34
    %p38 = pneg %p32
    %p39 = scmp.eq.s32.totalorder %s9, 1
    %p40 = por %p38, %p39
    %p41 = scmp.ne.s32.totalorder %s33, %s36
    %p42 = scmp.eq.s32.totalorder %s9, 0
    %p43 = por %p41, %p42
    %p44 = scmp.ne.s32.totalorder %s33, %s36
    %p45 = scmp.eq.s32.totalorder %s14, 1
    %p46 = por %p44, %p45
    %p47 = scmp.ne.s32.totalorder %s36, %s37
    %p48 = scmp.eq.s32.totalorder %s14, 0
    %p49 = por %p47, %p48
    %p50 = scmp.ne.s32.totalorder %s36, %s37
    %p51 = scmp.eq.s32.totalorder %s15, 1
    %p52 = por %p50, %p51
    %p54 = scmp.ne.s32.totalorder %s37, %s53
    %p55 = scmp.eq.s32.totalorder %s15, 0
    %p56 = por %p54, %p55
    %s58 = sadd.s32 %s57, 1
    %p61 = scmp.eq.s32.totalorder %s9, 1
    %p62 = scmp.ne.s32.totalorder %s57, %s59
    %p63 = scmp.eq.s32.totalorder %s9, 0
    %p64 = por %p62, %p63
    %p65 = scmp.ne.s32.totalorder %s57, %s59
    %p66 = scmp.eq.s32.totalorder %s14, 1
    %p67 = por %p65, %p66
    %p68 = scmp.ne.s32.totalorder %s59, %s60
    %p69 = scmp.eq.s32.totalorder %s14, 0
    %p70 = por %p68, %p69
    %p71 = scmp.ne.s32.totalorder %s59, %s60
    %p72 = scmp.eq.s32.totalorder %s15, 1
    %p73 = por %p71, %p72
    %p75 = scmp.ne.s32.totalorder %s60, %s74
    %p76 = scmp.eq.s32.totalorder %s15, 0
    %p77 = por %p75, %p76
    %s79 = sadd.s32 %s78, 1
    %p82 = scmp.eq.s32.totalorder %s9, 1
    %p83 = scmp.ne.s32.totalorder %s78, %s80
    %p84 = scmp.eq.s32.totalorder %s9, 0
    %p85 = por %p83, %p84
    %p86 = scmp.ne.s32.totalorder %s78, %s80
    %p87 = scmp.eq.s32.totalorder %s14, 1
    %p88 = por %p86, %p87
    %p89 = scmp.ne.s32.totalorder %s80, %s81
    %p90 = scmp.eq.s32.totalorder %s14, 0
    %p91 = por %p89, %p90
    %p92 = scmp.ne.s32.totalorder %s80, %s81
    %p93 = scmp.eq.s32.totalorder %s15, 1
    %p94 = por %p92, %p93
    %p96 = scmp.ne.s32.totalorder %s81, %s95
    %p97 = scmp.eq.s32.totalorder %s15, 0
    %p98 = por %p96, %p97
    %s99 = ssub.s32 %s16, %s28
    %s100 = ssub.s32 %s17, %s24
    %s101 = sor.u32 %s99, %s100
    %p102 = scmp.eq.s32.totalorder %s101, 0
    %s104 = sadd.s32 %s103, 1
    %s105 = scalar_select %p102, %s103, %s104
    %p108 = pneg %p102
    %p109 = scmp.eq.s32.totalorder %s9, 1
    %p110 = por %p108, %p109
    %p111 = scmp.ne.s32.totalorder %s103, %s106
    %p112 = scmp.eq.s32.totalorder %s9, 0
    %p113 = por %p111, %p112
    %p114 = scmp.ne.s32.totalorder %s103, %s106
    %p115 = scmp.eq.s32.totalorder %s14, 1
    %p116 = por %p114, %p115
    %p117 = scmp.ne.s32.totalorder %s106, %s107
    %p118 = scmp.eq.s32.totalorder %s14, 0
    %p119 = por %p117, %p118
    %p120 = scmp.ne.s32.totalorder %s106, %s107
    %p121 = scmp.eq.s32.totalorder %s15, 1
    %p122 = por %p120, %p121
    %p124 = scmp.ne.s32.totalorder %s107, %s123
    %p125 = scmp.eq.s32.totalorder %s15, 0
    %p126 = por %p124, %p125
    %p127 = scmp.le.s32.totalorder 1, %s9
    %p128 = scmp.lt.s32.totalorder %s9, 3
    %p129 = pnand %p127, %p128
    %p130 = pneg %p129
    // Predicated region
    $region9: #{tpu_custom_call.1} parent=5 // pred_check
      _
    $region10: #{tpu_custom_call.1} parent=5 // pred_check_branch
      %132 = sbr.rel (%p129) target = $region12
    $region11: #{tpu_custom_call.1} parent=5 // pred_region
      %s133 = ssub.s32 %s9, 1
      // Predicated region
      $region13: #{tpu_custom_call.1} parent=11 // pred_check
        %p134 = pneg %p70
      $region14: #{tpu_custom_call.1} parent=11 // pred_check_branch
        %136 = sbr.rel (%p134) target = $region16
      $region15: #{tpu_custom_call.1} parent=11 // pred_region
        _
      $region16: #{tpu_custom_call.1} parent=11 // pred_fallthru
        _
      // Predicated region
      $region17: #{tpu_custom_call.1} parent=11 // pred_check
        %p137 = pneg %p91
      $region18: #{tpu_custom_call.1} parent=11 // pred_check_branch
        %139 = sbr.rel (%p137) target = $region20
      $region19: #{tpu_custom_call.1} parent=11 // pred_region
        _
      $region20: #{tpu_custom_call.1} parent=11 // pred_fallthru
        _
    $region12: #{tpu_custom_call.1} parent=5 // pred_fallthru
      _
    %p140 = scmp.lt.s32.totalorder %s9, 2
    // Predicated region
    $region21: #{tpu_custom_call.1} parent=5 // pred_check
      %p141 = pneg %p140
    $region22: #{tpu_custom_call.1} parent=5 // pred_check_branch
      %143 = sbr.rel (%p141) target = $region24
    $region23: #{tpu_custom_call.1} parent=5 // pred_region
      // Predicated region
      $region25: #{tpu_custom_call.1} parent=23 // pred_check
        %p144 = pneg %p43
      $region26: #{tpu_custom_call.1} parent=23 // pred_check_branch
        %146 = sbr.rel (%p144) target = $region28
      $region27: #{tpu_custom_call.1} parent=23 // pred_region
        %p147 = scmp.lt.s32.totalorder %s16, 1
        %s148 = scalar_select %p147, %s16, 1
        %p149 = scmp.lt.s32.totalorder %s17, 0
        %s150 = scalar_select %p149, %s17, 0
        %s151 = smul.addr %s148, 6
        %s152 = sadd.s32 %s150, %s151
        %s153 = smul.addr %s152, 8
        %s154 = scalar_lea.vmem %s0, %s153
      $region28: #{tpu_custom_call.1} parent=23 // pred_fallthru
        _
    $region24: #{tpu_custom_call.1} parent=5 // pred_fallthru
      _
    %p155 = scmp.le.s32.totalorder 1, %s9
    %p156 = scmp.lt.s32.totalorder %s9, 3
    %p157 = pnand %p155, %p156
    %p158 = pneg %p157
    // Predicated region
    $region29: #{tpu_custom_call.1} parent=5 // pred_check
      _
    $region30: #{tpu_custom_call.1} parent=5 // pred_check_branch
      %160 = sbr.rel (%p157) target = $region32
    $region31: #{tpu_custom_call.1} parent=5 // pred_region
      %s161 = ssub.s32 %s9, 1
      %p162 = scmp.lt.s32.totalorder %s18, 1
      %s163 = scalar_select %p162, %s18, 1
      %p164 = scmp.lt.s32.totalorder %s19, 0
      %s165 = scalar_select %p164, %s19, 0
      %s166 = smul.addr %s163, 6
      %s167 = sadd.s32 %s165, %s166
      %s168 = smul.addr %s167, 8
      %s169 = scalar_lea.vmem %s0, %s168
      %p170 = pneg %p49
      %p171 = pneg %p46
      %p172 = pneg %p70
      %p173 = pneg %p67
      %p174 = pneg %p91
      %p175 = pneg %p88
      %p176 = pneg %p119
      %p177 = pneg %p116
      %p178 = scmp.lt.s32.totalorder %s18, 1
      %s179 = scalar_select %p178, %s18, 1
      %p180 = scmp.lt.s32.totalorder %s19, 0
      %s181 = scalar_select %p180, %s19, 0
      %s182 = smul.addr %s179, 12
      %s183 = sadd.s32 %s181, %s182
      %s184 = smul.addr %s183, 8
      %s185 = scalar_lea.vmem %s3, %s184
      %p186 = scmp.lt.s32.totalorder %s18, 1
      %s187 = scalar_select %p186, %s18, 1
      %p188 = scmp.lt.s32.totalorder %s19, 0
      %s189 = scalar_select %p188, %s19, 0
      %s190 = smul.addr %s187, 6
      %s191 = sadd.s32 %s189, %s190
      %s192 = smul.addr %s191, 8
      %s193 = scalar_lea.vmem %s0, %s192
      %p194 = scmp.lt.s32.totalorder %s18, 1
      %s195 = scalar_select %p194, %s18, 1
      %p196 = scmp.lt.s32.totalorder %s19, 0
      %s197 = scalar_select %p196, %s19, 0
      %s198 = smul.addr %s195, 12
      %s199 = sadd.s32 %s197, %s198
      %s200 = smul.addr %s199, 8
      %s201 = scalar_lea.vmem %s3, %s200
      %v202 = vld [vmem:[%s1] sm:$0xff]
      %v203 = vld [vmem:[%s1 + $0x8] sm:$0xff]
      %v204 = vld [vmem:[%s1 + $0x10] sm:$0xff]
      %v205 = vld [vmem:[%s1 + $0x18] sm:$0xff]
      %v206 = vld [vmem:[%s1 + $0x20] sm:$0xff]
      %v207 = vld [vmem:[%s1 + $0x28] sm:$0xff]
      %v208 = vld [vmem:[%s1 + $0x30] sm:$0xff]
      %v209 = vld [vmem:[%s1 + $0x38] sm:$0xff]
      %v210 = vld [vmem:[%s1 + $0x40] sm:$0xff]
      %v211 = vld [vmem:[%s1 + $0x48] sm:$0xff]
      %v212 = vld [vmem:[%s1 + $0x50] sm:$0xff]
      %v213 = vld [vmem:[%s1 + $0x58] sm:$0xff]
      %v214 = vld [vmem:[%s193] sm:$0xff]
      %v215 = vld [vmem:[%s193 + $0x8] sm:$0xff]
      %v216 = vld [vmem:[%s193 + $0x10] sm:$0xff]
      %v217 = vld [vmem:[%s193 + $0x18] sm:$0xff]
      %v218 = vld [vmem:[%s193 + $0x20] sm:$0xff]
      %v219 = vld [vmem:[%s193 + $0x28] sm:$0xff]
      %v220 = vld [vmem:[%s2] sm:$0xff]
      %v221 = vld [vmem:[%s2 + $0x8] sm:$0xff]
      %v222 = vld [vmem:[%s2 + $0x10] sm:$0xff]
      %v223 = vld [vmem:[%s2 + $0x18] sm:$0xff]
      %v224 = vld [vmem:[%s2 + $0x20] sm:$0xff]
      %v225 = vld [vmem:[%s2 + $0x28] sm:$0xff]
      %v226 = vld [vmem:[%s2 + $0x30] sm:$0xff]
      %v227 = vld [vmem:[%s2 + $0x38] sm:$0xff]
      %v228 = vld [vmem:[%s2 + $0x40] sm:$0xff]
      %v229 = vld [vmem:[%s2 + $0x48] sm:$0xff]
      %v230 = vld [vmem:[%s2 + $0x50] sm:$0xff]
      %v231 = vld [vmem:[%s2 + $0x58] sm:$0xff]
      %233 = vset.pattern.permute.xlu0 0
      %234 = vperm.xlu0 %233, %v220
      %v235 = vpop.permute.xlu0 %234
      %238 = vset.pattern.permute.xlu0 0
      %239 = vperm.xlu0 %238, %v221
      %v240 = vpop.permute.xlu0 %239
      %243 = vset.pattern.permute.xlu0 0
      %244 = vperm.xlu0 %243, %v222
      %v245 = vpop.permute.xlu0 %244
      %248 = vset.pattern.permute.xlu0 0
      %249 = vperm.xlu0 %248, %v223
      %v250 = vpop.permute.xlu0 %249
      %253 = vset.pattern.permute.xlu0 0
      %254 = vperm.xlu0 %253, %v224
      %v255 = vpop.permute.xlu0 %254
      %258 = vset.pattern.permute.xlu0 0
      %259 = vperm.xlu0 %258, %v225
      %v260 = vpop.permute.xlu0 %259
      %263 = vset.pattern.permute.xlu0 0
      %264 = vperm.xlu0 %263, %v226
      %v265 = vpop.permute.xlu0 %264
      %268 = vset.pattern.permute.xlu0 0
      %269 = vperm.xlu0 %268, %v227
      %v270 = vpop.permute.xlu0 %269
      %273 = vset.pattern.permute.xlu0 0
      %274 = vperm.xlu0 %273, %v228
      %v275 = vpop.permute.xlu0 %274
      %278 = vset.pattern.permute.xlu0 0
      %279 = vperm.xlu0 %278, %v229
      %v280 = vpop.permute.xlu0 %279
      %283 = vset.pattern.permute.xlu0 0
      %284 = vperm.xlu0 %283, %v230
      %v285 = vpop.permute.xlu0 %284
      %288 = vset.pattern.permute.xlu0 0
      %289 = vperm.xlu0 %288, %v231
      %v290 = vpop.permute.xlu0 %289
      %vm292 = vcmask 392192
      %v294 = vsel %vm292, %v202, 0
      %v297 = vsel %vm292, %v203, 0
      %v300 = vsel %vm292, %v204, 0
      %v303 = vsel %vm292, %v205, 0
      %v306 = vsel %vm292, %v206, 0
      %v309 = vsel %vm292, %v207, 0
      %v312 = vsel %vm292, %v208, 0
      %v315 = vsel %vm292, %v209, 0
      %v318 = vsel %vm292, %v210, 0
      %v321 = vsel %vm292, %v211, 0
      %v324 = vsel %vm292, %v212, 0
      %v327 = vsel %vm292, %v213, 0
      %329 = vmatprep.subr.mxu0 0.0
      %330 = vmatpush1.msra.mxu0 %v214
      %331 = vmatprep.subr.mxu0 0.0
      %332 = vmatpush1.msra.mxu0 %v215
      %333 = vmatprep.subr.mxu0 0.0
      %334 = vmatpush1.msra.mxu0 %v216
      %335 = vmatprep.subr.mxu0 0.0
      %336 = vmatpush1.msra.mxu0 %v217
      %337 = vmatprep.subr.mxu0 0.0
      %338 = vmatpush1.msra.mxu0 %v218
      %339 = vmatprep.subr.mxu0 0.0
      %340 = vmatpush1.msra.mxu0 %v219
      %341 = vmatprep.subr.mxu0 0.0
      %342 = vmatpush1.msra.mxu0 0.0
      %343 = vmatprep.subr.mxu0 0.0
      %344 = vmatpush1.msra.mxu0 0.0
      %345 = vmatprep.subr.mxu0 0.0
      %346 = vmatpush1.msra.mxu0 0.0
      %347 = vmatprep.subr.mxu0 0.0
      %348 = vmatpush1.msra.mxu0 0.0
      %349 = vmatprep.subr.mxu0 0.0
      %350 = vmatpush1.msra.mxu0 0.0
      %351 = vmatprep.subr.mxu0 0.0
      %352 = vmatpush1.msra.mxu0 0.0
      %353 = vmatprep.subr.mxu0 0.0
      %354 = vmatpush1.msra.mxu0 0.0
      %355 = vmatprep.subr.mxu0 0.0
      %356 = vmatpush1.msra.mxu0 0.0
      %357 = vmatprep.subr.mxu0 0.0
      %358 = vmatpush1.msra.mxu0 0.0
      %359 = vmatprep.subr.mxu0 0.0
      %360 = vmatpush1.msra.mxu0 0.0
      %361 = vmatprep.subr.mxu0 0.0
      %362 = vmatpush1.msra.mxu0 0.0
      %363 = vmatprep.subr.mxu0 0.0
      %364 = vmatpush1.msra.mxu0 0.0
      %365 = vmatprep.subr.mxu0 0.0
      %366 = vmatpush1.msra.mxu0 0.0
      %367 = vmatprep.subr.mxu0 0.0
      %368 = vmatpush1.msra.mxu0 0.0
      %369 = vmatprep.subr.mxu0 0.0
      %370 = vmatpush1.msra.mxu0 0.0
      %371 = vmatprep.subr.mxu0 0.0
      %372 = vmatpush1.msra.mxu0 0.0
      %373 = vmatprep.subr.mxu0 0.0
      %374 = vmatpush1.msra.mxu0 0.0
      %375 = vmatprep.subr.mxu0 0.0
      %376 = vmatpush1.msra.mxu0 0.0
      %377 = vmatprep.subr.mxu0 0.0
      %378 = vmatpush1.msra.mxu0 0.0
      %379 = vmatprep.subr.mxu0 0.0
      %380 = vmatpush1.msra.mxu0 0.0
      %381 = vmatprep.subr.mxu0 0.0
      %382 = vmatpush1.msra.mxu0 0.0
      %383 = vmatprep.subr.mxu0 0.0
      %384 = vmatpush1.msra.mxu0 0.0
      %385 = vmatprep.subr.mxu0 0.0
      %386 = vmatpush1.msra.mxu0 0.0
      %387 = vmatprep.subr.mxu0 0.0
      %388 = vmatpush1.msra.mxu0 0.0
      %389 = vmatprep.subr.mxu0 0.0
      %390 = vmatpush1.msra.mxu0 0.0
      %391 = vmatprep.subr.mxu0 0.0
      %392 = vmatpush1.msra.mxu0 0.0
      %393 = vmatprep.mubr.f32.mxu0 0.0
      %394 = vmatmul.mubr.f32.gmra.mrb[0].mxu0 %v294
      %v395 = vpop.f32.mrb[0].mxu0
      %v396 = vadd.f32 %v235, %v395
      %v397 = vpop.f32.mrb[0].mxu0
      %398 = vmatprep.mubr.f32.mxu0 0.0
      %399 = vmatmul.mubr.f32.gmra.mrb[0].mxu0 %v297
      %v400 = vpop.f32.mrb[0].mxu0
      %v401 = vadd.f32 %v240, %v400
      %v402 = vpop.f32.mrb[0].mxu0
      %403 = vmatprep.mubr.f32.mxu0 0.0
      %404 = vmatmul.mubr.f32.gmra.mrb[0].mxu0 %v300
      %v405 = vpop.f32.mrb[0].mxu0
      %v406 = vadd.f32 %v245, %v405
      %v407 = vpop.f32.mrb[0].mxu0
      %408 = vmatprep.mubr.f32.mxu0 0.0
      %409 = vmatmul.mubr.f32.gmra.mrb[0].mxu0 %v303
      %v410 = vpop.f32.mrb[0].mxu0
      %v411 = vadd.f32 %v250, %v410
      %v412 = vpop.f32.mrb[0].mxu0
      %413 = vmatprep.mubr.f32.mxu0 0.0
      %414 = vmatmul.mubr.f32.gmra.mrb[0].mxu0 %v306
      %v415 = vpop.f32.mrb[0].mxu0
      %v416 = vadd.f32 %v255, %v415
      %v417 = vpop.f32.mrb[0].mxu0
      %418 = vmatprep.mubr.f32.mxu0 0.0
      %419 = vmatmul.mubr.f32.gmra.mrb[0].mxu0 %v309
      %v420 = vpop.f32.mrb[0].mxu0
      %v421 = vadd.f32 %v260, %v420
      %v422 = vpop.f32.mrb[0].mxu0
      %423 = vmatprep.mubr.f32.mxu0 0.0
      %424 = vmatmul.mubr.f32.gmra.mrb[0].mxu0 %v312
      %v425 = vpop.f32.mrb[0].mxu0
      %v426 = vadd.f32 %v265, %v425
      %v427 = vpop.f32.mrb[0].mxu0
      %428 = vmatprep.mubr.f32.mxu0 0.0
      %429 = vmatmul.mubr.f32.gmra.mrb[0].mxu0 %v315
      %v430 = vpop.f32.mrb[0].mxu0
      %v431 = vadd.f32 %v270, %v430
      %v432 = vpop.f32.mrb[0].mxu0
      %433 = vmatprep.mubr.f32.mxu0 0.0
      %434 = vmatmul.mubr.f32.gmra.mrb[0].mxu0 %v318
      %v435 = vpop.f32.mrb[0].mxu0
      %v436 = vadd.f32 %v275, %v435
      %v437 = vpop.f32.mrb[0].mxu0
      %438 = vmatprep.mubr.f32.mxu0 0.0
      %439 = vmatmul.mubr.f32.gmra.mrb[0].mxu0 %v321
      %v440 = vpop.f32.mrb[0].mxu0
      %v441 = vadd.f32 %v280, %v440
      %v442 = vpop.f32.mrb[0].mxu0
      %443 = vmatprep.mubr.f32.mxu0 0.0
      %444 = vmatmul.mubr.f32.gmra.mrb[0].mxu0 %v324
      %v445 = vpop.f32.mrb[0].mxu0
      %v446 = vadd.f32 %v285, %v445
      %v447 = vpop.f32.mrb[0].mxu0
      %448 = vmatprep.mubr.f32.mxu0 0.0
      %449 = vmatmul.mubr.f32.gmra.mrb[0].mxu0 %v327
      %v450 = vpop.f32.mrb[0].mxu0
      %v451 = vadd.f32 %v290, %v450
      %v452 = vpop.f32.mrb[0].mxu0
      %453 = vdwg.mxu0
      %vm454 = vcmask 130048
      %455 = vst.msk [vmem:[%s201] sm:$0xff] %vm454, %v396
      %456 = vst.msk [vmem:[%s201 + $0x8] sm:$0xff] %vm454, %v401
      %457 = vst.msk [vmem:[%s201 + $0x10] sm:$0xff] %vm454, %v406
      %458 = vst.msk [vmem:[%s201 + $0x18] sm:$0xff] %vm454, %v411
      %459 = vst.msk [vmem:[%s201 + $0x20] sm:$0xff] %vm454, %v416
      %460 = vst.msk [vmem:[%s201 + $0x28] sm:$0xff] %vm454, %v421
      %461 = vst.msk [vmem:[%s201 + $0x30] sm:$0xff] %vm454, %v426
      %462 = vst.msk [vmem:[%s201 + $0x38] sm:$0xff] %vm454, %v431
      %463 = vst.msk [vmem:[%s201 + $0x40] sm:$0xff] %vm454, %v436
      %464 = vst.msk [vmem:[%s201 + $0x48] sm:$0xff] %vm454, %v441
      %465 = vst.msk [vmem:[%s201 + $0x50] sm:$0xff] %vm454, %v446
      %466 = vst.msk [vmem:[%s201 + $0x58] sm:$0xff] %vm454, %v451
      %p467 = scmp.lt.s32.totalorder %s18, 1
      %s468 = scalar_select %p467, %s18, 1
      %p469 = scmp.lt.s32.totalorder %s19, 0
      %s470 = scalar_select %p469, %s19, 0
      %s471 = smul.addr %s468, 12
      %s472 = sadd.s32 %s470, %s471
      %s473 = smul.addr %s472, 8
      %s474 = scalar_lea.vmem %s3, %s473
      // Predicated region
      $region33: #{tpu_custom_call.1} parent=31 // pred_check
        %p475 = pneg %p116
      $region34: #{tpu_custom_call.1} parent=31 // pred_check_branch
        %477 = sbr.rel (%p475) target = $region36
      $region35: #{tpu_custom_call.1} parent=31 // pred_region
        _
      $region36: #{tpu_custom_call.1} parent=31 // pred_fallthru
        _
    $region32: #{tpu_custom_call.1} parent=5 // pred_fallthru
      _
    %p478 = scmp.le.s32.totalorder 2, %s9
    // Predicated region
    $region37: #{tpu_custom_call.1} parent=5 // pred_check
      %p479 = pneg %p478
    $region38: #{tpu_custom_call.1} parent=5 // pred_check_branch
      %481 = sbr.rel (%p479) target = $region40
    $region39: #{tpu_custom_call.1} parent=5 // pred_region
      %s482 = ssub.s32 %s9, 2
      // Predicated region
      $region41: #{tpu_custom_call.1} parent=39 // pred_check
        %p483 = pneg %p122
      $region42: #{tpu_custom_call.1} parent=39 // pred_check_branch
        %485 = sbr.rel (%p483) target = $region44
      $region43: #{tpu_custom_call.1} parent=39 // pred_region
        %p486 = scmp.lt.s32.totalorder %s20, 1
        %s487 = scalar_select %p486, %s20, 1
        %p488 = scmp.lt.s32.totalorder %s21, 0
        %s489 = scalar_select %p488, %s21, 0
        %s490 = smul.addr %s487, 12
        %s491 = sadd.s32 %s489, %s490
        %s492 = smul.addr %s491, 8
        %s493 = scalar_lea.vmem %s3, %s492
      $region44: #{tpu_custom_call.1} parent=39 // pred_fallthru
        _
    $region40: #{tpu_custom_call.1} parent=5 // pred_fallthru
      _
  $region6: #{tpu_custom_call.1} parent=0 // loop_footer
    %s13 = sadd.s32 1, %s9
  $region7: #{tpu_custom_call.1} parent=0 // loop_footer_branch
    %8 = sbr.rel target = $region3
  $region8: #{tpu_custom_call.1} parent=0 // loop_exit
    _

</llo_original>
